<compile_context>
chip_gen: v6e
topology: v6e:2x2x1
jax: 0.10.0
libtpu: 0.0.40
codegen_flags: <defaults>
</compile_context>

<pallas_src>
import jax
import jax.numpy as jnp
from jax.experimental import pallas as pl
from jax.experimental.pallas import tpu as pltpu


def _round_up(x, m):
    return (x + m - 1) // m * m


def _cdiv(a, b):
    return (a + b - 1) // b


def _vmem_capacity_bytes():
    try:
        return int(pltpu.get_tpu_info().vmem_capacity_bytes)
    except Exception:
        return 64 * 1024 * 1024  # conservative: v7x per-TC VMEM


def _num_tensorcores():
    """Best-effort TensorCore-per-device count (2 on v7x, 1 on v5e/v6e)."""
    try:
        info = pltpu.get_tpu_info()
        for attr in ("num_cores", "tensorcore_count", "core_count"):
            n = getattr(info, attr, None)
            if n:
                return max(1, int(n))
    except Exception:
        pass
    try:
        dev = jax.devices()[0]
        for attr in ("num_cores", "core_count"):
            n = getattr(dev, attr, None)
            if n:
                return max(1, int(n))
    except Exception:
        pass
    return 1


def _choose_batch_tile(B, block_batch, num_tc, bm_cap):
    """Balanced batch tile: padding waste < 8 rows, even split across TCs."""
    block_batch = max(8, _round_up(block_batch, 8))
    bm_cap = max(8, (bm_cap // 8) * 8)
    target = min(block_batch, bm_cap)
    n_steps = _cdiv(B, target)
    if num_tc > 1 and B >= 8 * num_tc:
        # Only split for real TensorCore parallelism (v7x); keep steps balanced.
        n_steps = _round_up(n_steps, num_tc)
    bm = min(_round_up(_cdiv(B, n_steps), 8), bm_cap)
    n_steps = _cdiv(B, bm)
    return bm, n_steps


def prepare_mlp_params(weights, biases, param_dtype=None):
    """One-time parameter prep (hoisted out of the per-call forward wrapper).

    weights[i]: (in_dim, out_dim)  (= PyTorch Linear.weight.T)
    biases[i]:  (out_dim,) or (1, out_dim)
    param_dtype: optional cast (e.g. jnp.bfloat16) for MXU-native feed.
    Returns a flat tuple (w0, b0, w1, b1, ...) ready for mlp_obs_encoder_pallas.
    """
    assert len(weights) == len(biases) and len(weights) >= 1
    flat = []
    prev_out = None
    for w, b in zip(weights, biases):
        assert w.ndim == 2
        assert jnp.issubdtype(w.dtype, jnp.floating), (
            "MLPObsEncoder kernel expects floating-point weights "
            "(int/quantized weights would be silently truncated).")
        if prev_out is not None:
            assert w.shape[0] == prev_out, "layer width mismatch"
        prev_out = w.shape[1]
        b = jnp.reshape(b, (1, -1))
        assert b.shape[1] == w.shape[1]
        if param_dtype is not None:
            w = w.astype(param_dtype)
            b = b.astype(param_dtype)
        flat.append(w)
        flat.append(b)
    return tuple(flat)


def _make_mlp_kernel(num_layers):
    """Kernel computing num_layers x (Linear + ReLU), fully fused in VMEM."""

    def kernel(x_ref, *refs):
        # refs = (w0, b0, w1, b1, ..., w_{L-1}, b_{L-1}, out_ref)
        out_ref = refs[-1]
        params = refs[:-1]
        h = x_ref[...]
        for i in range(num_layers):
            w = params[2 * i][...]
            b = params[2 * i + 1][...].astype(jnp.float32)
            if h.dtype != w.dtype:
                h = h.astype(w.dtype)  # MXU-native feed (bf16 stays bf16)
            h = jnp.dot(h, w, preferred_element_type=jnp.float32)
            h = jnp.maximum(h + b, 0.0)  # f32 epilogue
            if i + 1 < num_layers:
                # Carry inter-layer activations in the next weight's dtype
                # (halves VMEM vld/vst traffic for bf16 params).
                h = h.astype(params[2 * (i + 1)].dtype)
        out_ref[...] = h.astype(out_ref.dtype)

    return kernel


def mlp_obs_encoder_pallas(obs, params, *, block_batch=512):
    """Forward pass of MLPObsEncoder.

    obs:    (B, obs_dim)
    params: flat tuple from prepare_mlp_params -> (w0, b0, w1, b1, ...)
    """
    num_layers = len(params) // 2
    assert num_layers >= 1 and len(params) == 2 * num_layers
    weights = params[0::2]
    biases = params[1::2]

    B, obs_dim = obs.shape
    assert weights[0].shape[0] == obs_dim
    out_dim = weights[-1].shape[1]
    out_dtype = obs.dtype

    param_bytes = sum(int(p.size) * p.dtype.itemsize for p in params)

    # ---- VMEM budget (single-buffered params + double-buffered act tiles) ----
    vmem_cap = _vmem_capacity_bytes()
    avail = int(vmem_cap * 0.8) - param_bytes
    if avail <= 0:
        # TODO(synk): stream weights per layer from HBM (pl.ANY +
        # pltpu.emit_pipeline) instead of the all-resident strategy.
        raise ValueError(
            f"MLP parameters ({param_bytes} B) do not fit the ~{vmem_cap} B "
            "VMEM budget with the all-resident strategy; cast to bf16 or "
            "stream weights from HBM.")

    widths = [obs_dim] + [int(w.shape[1]) for w in weights]
    max_width = max(widths)
    # Per-row VMEM cost: double-buffered obs & out tiles + f32 scratch (x2) for
    # the widest intermediate activation.
    per_row = (2 * obs_dim * obs.dtype.itemsize
               + 2 * out_dim * jnp.dtype(out_dtype).itemsize
               + 2 * max_width * 4)
    bm_cap = max(8, (avail // max(per_row, 1)))

    num_tc = _num_tensorcores()
    bm, n_steps = _choose_batch_tile(B, block_batch, num_tc, bm_cap)

    # ---- BlockSpecs ----
    # obs/out tile over the batch only; weights/biases are full blocks with a
    # constant index_map (fetched once, single-buffered).
    in_specs = [pl.BlockSpec((bm, obs_dim), lambda i: (i, 0))]
    for w, b in zip(weights, biases):
        in_specs.append(pl.BlockSpec(w.shape, lambda i: (0, 0),
                                     pipeline_mode=pl.Buffered(1)))
        in_specs.append(pl.BlockSpec(b.shape, lambda i: (0, 0),
                                     pipeline_mode=pl.Buffered(1)))
    out_spec = pl.BlockSpec((bm, out_dim), lambda i: (i, 0))

    needed = int(1.25 * (param_bytes + bm * per_row))
    vmem_limit = int(min(vmem_cap, max(needed, 32 * 1024 * 1024)))

    flops = 2 * B * sum(int(w.shape[0]) * int(w.shape[1]) for w in weights)
    bytes_accessed = (int(obs.size) * obs.dtype.itemsize
                      + param_bytes
                      + B * out_dim * jnp.dtype(out_dtype).itemsize)

    return pl.pallas_call(
        _make_mlp_kernel(num_layers),
        out_shape=jax.ShapeDtypeStruct((B, out_dim), out_dtype),
        grid=(n_steps,),
        in_specs=in_specs,
        out_specs=out_spec,
        compiler_params=pltpu.CompilerParams(
            dimension_semantics=("parallel",),
            vmem_limit_bytes=vmem_limit),
        cost_estimate=pl.CostEstimate(
            flops=flops, transcendentals=0, bytes_accessed=bytes_accessed),
    )(obs, *params)


def init_mlp_params(key, dims, dtype=jnp.float32):
    """Deterministic init matching nn.Linear default (Kaiming-uniform-ish).

    dims = [obs_dim, h0, h1, ...]; returns (weights, biases) with
    weights[i]: (dims[i], dims[i+1]) (= PyTorch W.T), biases[i]: (1, dims[i+1]).
    """
    weights, biases = [], []
    for d_in, d_out in zip(dims[:-1], dims[1:]):
        key, kw, kb = jax.random.split(key, 3)
        bound = 1.0 / jnp.sqrt(d_in)
        w = jax.random.uniform(kw, (d_in, d_out), jnp.float32, -bound, bound)
        b = jax.random.uniform(kb, (1, d_out), jnp.float32, -bound, bound)
        weights.append(w.astype(dtype))
        biases.append(b.astype(dtype))
    return weights, biases


def mlp_obs_encoder_ref(obs, weights, biases):
    h = obs.astype(jnp.float32)
    for w, b in zip(weights, biases):
        h = jnp.maximum(h @ w.astype(jnp.float32)
                        + jnp.reshape(b, (1, -1)).astype(jnp.float32), 0.0)
    return h.astype(obs.dtype)


if __name__ == "__main__":
    key = jax.random.PRNGKey(0)

    # MLPObsEncoder(obs_dim=24, hidden_size=[32, 32]) -> mlp_dims = [24, 32, 32]
    batch = 8
    obs_dim = 24
    hidden_size = [32, 32]
    mlp_dims = [obs_dim] + hidden_size

    key, k_obs, k_params = jax.random.split(key, 3)
    obs = jax.random.normal(k_obs, (batch, obs_dim), dtype=jnp.float32)
    weights, biases = init_mlp_params(k_params, mlp_dims)

    # One-time parameter preparation (hoisted out of the forward path).
    # Note: for bf16 params (param_dtype=jnp.bfloat16) the comparison tolerance
    # below would need to be loosened accordingly.
    params = prepare_mlp_params(weights, biases)

    out = mlp_obs_encoder_pallas(obs, params)
    out = jax.block_until_ready(out)

    ref = mlp_obs_encoder_ref(obs, weights, biases)
    assert out.shape == (batch, mlp_dims[-1])
    assert jnp.allclose(out, ref, atol=1e-4, rtol=1e-4), "mismatch vs reference"

    print("KERNEL_OK")
</pallas_src>

<mosaic_0001>
module attributes {stable_mosaic.version = 11 : i64} {
  func.func @kernel(%arg0: i32, %arg1: memref<8x24xf32, #tpu.memory_space<vmem>>, %arg2: memref<24x32xf32, #tpu.memory_space<vmem>>, %arg3: memref<1x32xf32, #tpu.memory_space<vmem>>, %arg4: memref<32x32xf32, #tpu.memory_space<vmem>>, %arg5: memref<1x32xf32, #tpu.memory_space<vmem>>, %arg6: memref<8x32xf32, #tpu.memory_space<vmem>>) attributes {dimension_semantics = [#tpu.dimension_semantics<parallel>], iteration_bounds = array<i64: 1>, scalar_prefetch = 0 : i64, scratch_operands = 0 : i64, tpu.core_type = #tpu.core_type<tc>, window_params = [{transform_indices = @transform_0, window_bounds = array<i64: 8, 24>}, {pipeline_mode = #tpu.pipeline_mode<synchronous>, transform_indices = @transform_1, window_bounds = array<i64: 24, 32>}, {pipeline_mode = #tpu.pipeline_mode<synchronous>, transform_indices = @transform_2, window_bounds = array<i64: 1, 32>}, {pipeline_mode = #tpu.pipeline_mode<synchronous>, transform_indices = @transform_3, window_bounds = array<i64: 32, 32>}, {pipeline_mode = #tpu.pipeline_mode<synchronous>, transform_indices = @transform_4, window_bounds = array<i64: 1, 32>}, {transform_indices = @transform_5, window_bounds = array<i64: 8, 32>}]} {
    %c0 = arith.constant 0 : index
    %c0_0 = arith.constant 0 : index
    %0 = vector.load %arg1[%c0, %c0_0] : memref<8x24xf32, #tpu.memory_space<vmem>>, vector<8x24xf32>
    %c0_1 = arith.constant 0 : index
    %c0_2 = arith.constant 0 : index
    %1 = vector.load %arg2[%c0_1, %c0_2] : memref<24x32xf32, #tpu.memory_space<vmem>>, vector<24x32xf32>
    %c0_3 = arith.constant 0 : index
    %c0_4 = arith.constant 0 : index
    %2 = vector.load %arg3[%c0_3, %c0_4] : memref<1x32xf32, #tpu.memory_space<vmem>>, vector<1x32xf32>
    %cst = arith.constant dense<0.000000e+00> : vector<8x32xf32>
    %3 = tpu.matmul %0, %1, %cst {dimension_numbers = #tpu.dot_dimension_numbers<[1], [0], [0], [1], [0, 0, 1, 1], [], []>} : vector<8x24xf32>, vector<24x32xf32>, vector<8x32xf32> -> vector<8x32xf32>
    %4 = vector.broadcast %2 : vector<1x32xf32> to vector<8x32xf32>
    %5 = arith.addf %3, %4 : vector<8x32xf32>
    %cst_5 = arith.constant 0.000000e+00 : f32
    %6 = vector.broadcast %cst_5 : f32 to vector<8x32xf32>
    %7 = arith.maximumf %5, %6 : vector<8x32xf32>
    %c0_6 = arith.constant 0 : index
    %c0_7 = arith.constant 0 : index
    %8 = vector.load %arg4[%c0_6, %c0_7] : memref<32x32xf32, #tpu.memory_space<vmem>>, vector<32x32xf32>
    %c0_8 = arith.constant 0 : index
    %c0_9 = arith.constant 0 : index
    %9 = vector.load %arg5[%c0_8, %c0_9] : memref<1x32xf32, #tpu.memory_space<vmem>>, vector<1x32xf32>
    %cst_10 = arith.constant dense<0.000000e+00> : vector<8x32xf32>
    %10 = tpu.matmul %7, %8, %cst_10 {dimension_numbers = #tpu.dot_dimension_numbers<[1], [0], [0], [1], [0, 0, 1, 1], [], []>} : vector<8x32xf32>, vector<32x32xf32>, vector<8x32xf32> -> vector<8x32xf32>
    %11 = vector.broadcast %9 : vector<1x32xf32> to vector<8x32xf32>
    %12 = arith.addf %10, %11 : vector<8x32xf32>
    %cst_11 = arith.constant 0.000000e+00 : f32
    %13 = vector.broadcast %cst_11 : f32 to vector<8x32xf32>
    %14 = arith.maximumf %12, %13 : vector<8x32xf32>
    %c0_12 = arith.constant 0 : index
    %c0_13 = arith.constant 0 : index
    %15 = vector.load %arg6[%c0_12, %c0_13] : memref<8x32xf32, #tpu.memory_space<vmem>>, vector<8x32xf32>
    tpu.vector_store %arg6[%c0_12, %c0_13], %14 {strides = array<i32>} : memref<8x32xf32, #tpu.memory_space<vmem>>, vector<8x32xf32>,
    return
  }
  func.func @transform_0(%arg0: i32) -> (i32, i32) {
    %c0_i32 = arith.constant 0 : i32
    %c0_i32_0 = arith.constant 0 : i32
    return %arg0, %c0_i32 : i32, i32
  }
  func.func @transform_1(%arg0: i32) -> (i32, i32) {
    %c0_i32 = arith.constant 0 : i32
    %c0_i32_0 = arith.constant 0 : i32
    %c0_i32_1 = arith.constant 0 : i32
    return %c0_i32, %c0_i32_0 : i32, i32
  }
  func.func @transform_2(%arg0: i32) -> (i32, i32) {
    %c0_i32 = arith.constant 0 : i32
    %c0_i32_0 = arith.constant 0 : i32
    %c0_i32_1 = arith.constant 0 : i32
    return %c0_i32, %c0_i32_0 : i32, i32
  }
  func.func @transform_3(%arg0: i32) -> (i32, i32) {
    %c0_i32 = arith.constant 0 : i32
    %c0_i32_0 = arith.constant 0 : i32
    %c0_i32_1 = arith.constant 0 : i32
    return %c0_i32, %c0_i32_0 : i32, i32
  }
  func.func @transform_4(%arg0: i32) -> (i32, i32) {
    %c0_i32 = arith.constant 0 : i32
    %c0_i32_0 = arith.constant 0 : i32
    %c0_i32_1 = arith.constant 0 : i32
    return %c0_i32, %c0_i32_0 : i32, i32
  }
  func.func @transform_5(%arg0: i32) -> (i32, i32) {
    %c0_i32 = arith.constant 0 : i32
    %c0_i32_0 = arith.constant 0 : i32
    return %arg0, %c0_i32 : i32, i32
  }
}

</mosaic_0001>

<llo_original>
// kernel: tpu_custom_call.1
$region0: #{tpu_custom_call.1}
  #allocation0 [shape = 'u32[]', space=smem, size = 0x4, offset = 0x4, fixed_abs, tag = 'smem constant byte address 0x4 - core index']
  #allocation1 [shape = 'u32[144,128]{1,0:T(1,128)}', space=vmem, size = 0x12000, scoped, tag = 'internal scratch']
  %s0 = inlined_call_operand.hbm [shape: f32[8,24], index: 0, kind: input, shape index: {}]
  %s1 = inlined_call_operand.hbm [shape: f32[24,32], index: 1, kind: input, shape index: {}]
  %s2 = inlined_call_operand.vmem [shape: f32[1,32], index: 2, kind: input, shape index: {}]
  %s3 = inlined_call_operand.hbm [shape: f32[32,32], index: 3, kind: input, shape index: {}]
  %s4 = inlined_call_operand.vmem [shape: f32[1,32], index: 4, kind: input, shape index: {}]
  %s5 = inlined_call_operand.hbm [shape: f32[8,32], index: 5, kind: output, shape index: {}]
  %s6 = sld [smem:[#allocation0]]
  $region42: #{tpu_custom_call.1} parent=0
    _
  %s8 = ssub.s32 1, %s6
  %s9 = scalar_select 0, %s8, %s6
  $region1: #{tpu_custom_call.1} parent=0
    #allocation2 [shape = 'u8[4096]{0}', space=vmem, size = 0x1000, scoped, tag = 'input window, operand 0, single buffered']
    #allocation3 [shape = 's32[1]{0}', space=sflag, size = 0x4, scoped, tag = 'scoped memory for tpu_custom_call.1']
    #allocation4 [shape = 's32[1]{0}', space=sflag, size = 0x4, scoped, tag = 'scoped memory for tpu_custom_call.1']
    #allocation5 [shape = 'u8[12288]{0}', space=vmem, size = 0x3000, scoped, tag = 'input window, operand 1, single buffered']
    #allocation6 [shape = 's32[1]{0}', space=sflag, size = 0x4, scoped, tag = 'scoped memory for tpu_custom_call.1']
    #allocation7 [shape = 'u8[16384]{0}', space=vmem, size = 0x4000, scoped, tag = 'input window, operand 3, single buffered']
    #allocation8 [shape = 'u8[4096]{0}', space=vmem, size = 0x1000, scoped, tag = 'output window, operand 0, single buffered']
    %10 = vsyncpa [#allocation3], 0
    %11 = vsyncpa [#allocation6], 0
    %12 = vsyncpa [#allocation4], 0
    // Predicated region
    $region2: #{tpu_custom_call.1} parent=1 // pred_check
      _
    $region3: #{tpu_custom_call.1} parent=1 // pred_check_branch
      %14 = sbr.rel (0) target = $region5
    $region4: #{tpu_custom_call.1} parent=1 // pred_region
      %s16 = ssub.s32 128, 128
      %17 = vsyncadd [#allocation3], %s16
      %s19 = sshll.u32 [#allocation2], 4
      %s20 = int_to_ptr.vmem [resolvable:$true] %s19
      %22 = dma.hbm_to_vmem [thread:$0]  %s0, 128, %s20, [#allocation3]
    $region5: #{tpu_custom_call.1} parent=1 // pred_fallthru
      _
    // Predicated region
    $region6: #{tpu_custom_call.1} parent=1 // pred_check
      _
    $region7: #{tpu_custom_call.1} parent=1 // pred_check_branch
      %24 = sbr.rel (0) target = $region9
    $region8: #{tpu_custom_call.1} parent=1 // pred_region
      %s26 = ssub.s32 384, 384
      %27 = vsyncadd [#allocation6], %s26
      %s28 = sshll.u32 [#allocation5], 4
      %s29 = int_to_ptr.vmem [resolvable:$true] %s28
      %34 = dma.hbm_to_vmem [thread:$0]  %s1, 384, %s29, [#allocation6], 128, 128, 8
    $region9: #{tpu_custom_call.1} parent=1 // pred_fallthru
      _
    // Predicated region
    $region10: #{tpu_custom_call.1} parent=1 // pred_check
      _
    $region11: #{tpu_custom_call.1} parent=1 // pred_check_branch
      %36 = sbr.rel (0) target = $region13
    $region12: #{tpu_custom_call.1} parent=1 // pred_region
      _
    $region13: #{tpu_custom_call.1} parent=1 // pred_fallthru
      _
    // Predicated region
    $region14: #{tpu_custom_call.1} parent=1 // pred_check
      _
    $region15: #{tpu_custom_call.1} parent=1 // pred_check_branch
      %38 = sbr.rel (0) target = $region17
    $region16: #{tpu_custom_call.1} parent=1 // pred_region
      %s40 = ssub.s32 512, 512
      %41 = vsyncadd [#allocation6], %s40
      %s42 = sshll.u32 [#allocation7], 4
      %s43 = int_to_ptr.vmem [resolvable:$true] %s42
      %48 = dma.hbm_to_vmem [thread:$0]  %s3, 512, %s43, [#allocation6], 128, 128, 8
    $region17: #{tpu_custom_call.1} parent=1 // pred_fallthru
      _
    // Predicated region
    $region18: #{tpu_custom_call.1} parent=1 // pred_check
      _
    $region19: #{tpu_custom_call.1} parent=1 // pred_check_branch
      %50 = sbr.rel (0) target = $region21
    $region20: #{tpu_custom_call.1} parent=1 // pred_region
      _
    $region21: #{tpu_custom_call.1} parent=1 // pred_fallthru
      _
    // Predicated region
    $region22: #{tpu_custom_call.1} parent=1 // pred_check
      _
    $region23: #{tpu_custom_call.1} parent=1 // pred_check_branch
      %52 = sbr.rel (0) target = $region25
    $region24: #{tpu_custom_call.1} parent=1 // pred_region
      %53 = dma.done [#allocation3], 128
    $region25: #{tpu_custom_call.1} parent=1 // pred_fallthru
      _
    // Predicated region
    $region26: #{tpu_custom_call.1} parent=1 // pred_check
      _
    $region27: #{tpu_custom_call.1} parent=1 // pred_check_branch
      %55 = sbr.rel (0) target = $region29
    $region28: #{tpu_custom_call.1} parent=1 // pred_region
      %56 = dma.done [#allocation6], 384
    $region29: #{tpu_custom_call.1} parent=1 // pred_fallthru
      _
    // Predicated region
    $region30: #{tpu_custom_call.1} parent=1 // pred_check
      _
    $region31: #{tpu_custom_call.1} parent=1 // pred_check_branch
      %58 = sbr.rel (0) target = $region33
    $region32: #{tpu_custom_call.1} parent=1 // pred_region
      %59 = dma.done [#allocation6], 512
    $region33: #{tpu_custom_call.1} parent=1 // pred_fallthru
      _
    %v60 = vld [vmem:[#allocation2] sm:$0xff]
    %v61 = vld [vmem:[#allocation5] sm:$0xff]
    %v62 = vld [vmem:[#allocation5 + $0x8] sm:$0xff]
    %v63 = vld [vmem:[#allocation5 + $0x10] sm:$0xff]
    %v64 = vld [vmem:[%s2] sm:$0x1]
    %v66 = vlaneseq
    %v67 = vshrl.u32 %v66, 7
    %v68 = vsub.s32 0, %v67
    %v69 = vrot.slane %v64, %v68
    %vm71 = vcmask 195584
    %v73 = vsel %vm71, %v60, 0
    %75 = vmatprep.subr.mxu0 0.0
    %76 = vmatpush1.msra.mxu0 0.0
    %77 = vmatprep.subr.mxu0 0.0
    %78 = vmatpush1.msra.mxu0 0.0
    %79 = vmatprep.subr.mxu0 0.0
    %80 = vmatpush1.msra.mxu0 0.0
    %81 = vmatprep.subr.mxu0 0.0
    %82 = vmatpush1.msra.mxu0 0.0
    %83 = vmatprep.subr.mxu0 0.0
    %84 = vmatpush1.msra.mxu0 0.0
    %85 = vmatprep.subr.mxu0 0.0
    %86 = vmatpush1.msra.mxu0 0.0
    %87 = vmatprep.subr.mxu0 0.0
    %88 = vmatpush1.msra.mxu0 0.0
    %89 = vmatprep.subr.mxu0 0.0
    %90 = vmatpush1.msra.mxu0 0.0
    %91 = vmatprep.subr.mxu0 0.0
    %92 = vmatpush1.msra.mxu0 0.0
    %93 = vmatprep.subr.mxu0 0.0
    %94 = vmatpush1.msra.mxu0 0.0
    %95 = vmatprep.subr.mxu0 0.0
    %96 = vmatpush1.msra.mxu0 0.0
    %97 = vmatprep.subr.mxu0 0.0
    %98 = vmatpush1.msra.mxu0 0.0
    %99 = vmatprep.subr.mxu0 0.0
    %100 = vmatpush1.msra.mxu0 0.0
    %101 = vmatprep.subr.mxu0 0.0
    %102 = vmatpush1.msra.mxu0 %v63
    %103 = vmatprep.subr.mxu0 0.0
    %104 = vmatpush1.msra.mxu0 %v62
    %105 = vmatprep.subr.mxu0 0.0
    %106 = vmatpush1.msra.mxu0 %v61
    %107 = vmatprep.subr.mxu0 0.0
    %108 = vmatpush2.msra.mxu0 0.0
    %109 = vmatprep.subr.mxu0 0.0
    %110 = vmatpush2.msra.mxu0 0.0
    %111 = vmatprep.subr.mxu0 0.0
    %112 = vmatpush2.msra.mxu0 0.0
    %113 = vmatprep.subr.mxu0 0.0
    %114 = vmatpush2.msra.mxu0 0.0
    %115 = vmatprep.subr.mxu0 0.0
    %116 = vmatpush2.msra.mxu0 0.0
    %117 = vmatprep.subr.mxu0 0.0
    %118 = vmatpush2.msra.mxu0 0.0
    %119 = vmatprep.subr.mxu0 0.0
    %120 = vmatpush2.msra.mxu0 0.0
    %121 = vmatprep.subr.mxu0 0.0
    %122 = vmatpush2.msra.mxu0 0.0
    %123 = vmatprep.subr.mxu0 0.0
    %124 = vmatpush2.msra.mxu0 0.0
    %125 = vmatprep.subr.mxu0 0.0
    %126 = vmatpush2.msra.mxu0 0.0
    %127 = vmatprep.subr.mxu0 0.0
    %128 = vmatpush2.msra.mxu0 0.0
    %129 = vmatprep.subr.mxu0 0.0
    %130 = vmatpush2.msra.mxu0 0.0
    %131 = vmatprep.subr.mxu0 0.0
    %132 = vmatpush2.msra.mxu0 0.0
    %133 = vmatprep.subr.mxu0 0.0
    %134 = vmatpush2.msra.mxu0 0.0
    %135 = vmatprep.subr.mxu0 0.0
    %136 = vmatpush2.msra.mxu0 0.0
    %137 = vmatprep.subr.mxu0 0.0
    %138 = vmatpush2.msra.mxu0 0.0
    %139 = vmatprep.mubr.f32.mxu0 0.0
    %140 = vmatmul.mubr.f32.gmra.mxu0 %v73
    %v141 = vpop.f32.mrf.mxu0
    %v142 = vadd.f32 %v69, %v141
    %v143 = vpop.f32.mrf.mxu0
    %144 = vdwg.mxu0
    %v145 = vmax.f32 %v142, 0.0
    %v146 = vld [vmem:[#allocation7] sm:$0xff]
    %v147 = vld [vmem:[#allocation7 + $0x8] sm:$0xff]
    %v148 = vld [vmem:[#allocation7 + $0x10] sm:$0xff]
    %v149 = vld [vmem:[#allocation7 + $0x18] sm:$0xff]
    %v150 = vld [vmem:[%s4] sm:$0x1]
    %v152 = vlaneseq
    %v153 = vshrl.u32 %v152, 7
    %v154 = vsub.s32 0, %v153
    %v155 = vrot.slane %v150, %v154
    %vm157 = vcmask 261120
    %v159 = vsel %vm157, %v145, 0
    %161 = vmatprep.subr.mxu0 0.0
    %162 = vmatpush1.msra.mxu0 0.0
    %163 = vmatprep.subr.mxu0 0.0
    %164 = vmatpush1.msra.mxu0 0.0
    %165 = vmatprep.subr.mxu0 0.0
    %166 = vmatpush1.msra.mxu0 0.0
    %167 = vmatprep.subr.mxu0 0.0
    %168 = vmatpush1.msra.mxu0 0.0
    %169 = vmatprep.subr.mxu0 0.0
    %170 = vmatpush1.msra.mxu0 0.0
    %171 = vmatprep.subr.mxu0 0.0
    %172 = vmatpush1.msra.mxu0 0.0
    %173 = vmatprep.subr.mxu0 0.0
    %174 = vmatpush1.msra.mxu0 0.0
    %175 = vmatprep.subr.mxu0 0.0
    %176 = vmatpush1.msra.mxu0 0.0
    %177 = vmatprep.subr.mxu0 0.0
    %178 = vmatpush1.msra.mxu0 0.0
    %179 = vmatprep.subr.mxu0 0.0
    %180 = vmatpush1.msra.mxu0 0.0
    %181 = vmatprep.subr.mxu0 0.0
    %182 = vmatpush1.msra.mxu0 0.0
    %183 = vmatprep.subr.mxu0 0.0
    %184 = vmatpush1.msra.mxu0 0.0
    %185 = vmatprep.subr.mxu0 0.0
    %186 = vmatpush1.msra.mxu0 %v149
    %187 = vmatprep.subr.mxu0 0.0
    %188 = vmatpush1.msra.mxu0 %v148
    %189 = vmatprep.subr.mxu0 0.0
    %190 = vmatpush1.msra.mxu0 %v147
    %191 = vmatprep.subr.mxu0 0.0
    %192 = vmatpush1.msra.mxu0 %v146
    %193 = vmatprep.subr.mxu0 0.0
    %194 = vmatpush2.msra.mxu0 0.0
    %195 = vmatprep.subr.mxu0 0.0
    %196 = vmatpush2.msra.mxu0 0.0
    %197 = vmatprep.subr.mxu0 0.0
    %198 = vmatpush2.msra.mxu0 0.0
    %199 = vmatprep.subr.mxu0 0.0
    %200 = vmatpush2.msra.mxu0 0.0
    %201 = vmatprep.subr.mxu0 0.0
    %202 = vmatpush2.msra.mxu0 0.0
    %203 = vmatprep.subr.mxu0 0.0
    %204 = vmatpush2.msra.mxu0 0.0
    %205 = vmatprep.subr.mxu0 0.0
    %206 = vmatpush2.msra.mxu0 0.0
    %207 = vmatprep.subr.mxu0 0.0
    %208 = vmatpush2.msra.mxu0 0.0
    %209 = vmatprep.subr.mxu0 0.0
    %210 = vmatpush2.msra.mxu0 0.0
    %211 = vmatprep.subr.mxu0 0.0
    %212 = vmatpush2.msra.mxu0 0.0
    %213 = vmatprep.subr.mxu0 0.0
    %214 = vmatpush2.msra.mxu0 0.0
    %215 = vmatprep.subr.mxu0 0.0
    %216 = vmatpush2.msra.mxu0 0.0
    %217 = vmatprep.subr.mxu0 0.0
    %218 = vmatpush2.msra.mxu0 0.0
    %219 = vmatprep.subr.mxu0 0.0
    %220 = vmatpush2.msra.mxu0 0.0
    %221 = vmatprep.subr.mxu0 0.0
    %222 = vmatpush2.msra.mxu0 0.0
    %223 = vmatprep.subr.mxu0 0.0
    %224 = vmatpush2.msra.mxu0 0.0
    %225 = vmatprep.mubr.f32.mxu0 0.0
    %226 = vmatmul.mubr.f32.gmra.mxu0 %v159
    %v227 = vpop.f32.mrf.mxu0
    %v228 = vadd.f32 %v155, %v227
    %v229 = vpop.f32.mrf.mxu0
    %230 = vdwg.mxu0
    %v231 = vmax.f32 %v228, 0.0
    %232 = vst.msk [vmem:[#allocation8] sm:$0xff] %vm157, %v231
    // Predicated region
    $region34: #{tpu_custom_call.1} parent=1 // pred_check
      _
    $region35: #{tpu_custom_call.1} parent=1 // pred_check_branch
      %234 = sbr.rel (0) target = $region37
    $region36: #{tpu_custom_call.1} parent=1 // pred_region
      %s236 = ssub.s32 128, 128
      %237 = vsyncadd [#allocation4], %s236
      %s239 = sshll.u32 [#allocation8], 4
      %s240 = int_to_ptr.vmem [resolvable:$true] %s239
      %242 = dma.vmem_to_hbm [thread:$0]  %s240, 128, %s5, [#allocation4]
    $region37: #{tpu_custom_call.1} parent=1 // pred_fallthru
      _
    // Predicated region
    $region38: #{tpu_custom_call.1} parent=1 // pred_check
      _
    $region39: #{tpu_custom_call.1} parent=1 // pred_check_branch
      %244 = sbr.rel (0) target = $region41
    $region40: #{tpu_custom_call.1} parent=1 // pred_region
      %245 = dma.done [#allocation4], 128
    $region41: #{tpu_custom_call.1} parent=1 // pred_fallthru
      _
    %246 = vsyncpa [#allocation3], 1
    %247 = vsyncpa [#allocation6], 1
    %248 = vsyncpa [#allocation4], 1

</llo_original>
